<compile_context>
chip_gen: v6e
topology: v6e:2x2x1
jax: 0.10.0
libtpu: 0.0.40
codegen_flags: <defaults>
</compile_context>

<pallas_src>
import jax
import jax.numpy as jnp
from jax.experimental import pallas as pl
from jax.experimental.pallas import tpu as pltpu

_TARGET_BLOCK_BYTES = 4 * 1024 * 1024   # per-buffer block size target
_VMEM_LIMIT_BYTES = 24 * 1024 * 1024    # headroom over 4 bufs x 4 MiB = 16 MiB


def _swish_kernel(x_ref, o_ref):
    xf = x_ref[...].astype(jnp.float32)
    # x * sigmoid(x) == y * tanh(y) + y  with y = x/2  (single EUP op).
    y = 0.5 * xf
    o_ref[...] = (y * jnp.tanh(y) + y).astype(o_ref.dtype)


def _swish_jnp(x):
    # Plain-JAX fallback for tiny tails (< 128 elements).
    xf = x.astype(jnp.float32)
    return (xf * jax.nn.sigmoid(xf)).astype(x.dtype)


def _swish_impl(x):
    if not jnp.issubdtype(x.dtype, jnp.floating):
        raise TypeError(f"swish kernel requires a floating dtype, got {x.dtype}")

    orig_shape = x.shape
    n = x.size
    if n == 0:
        return x

    x_flat = jnp.ravel(x)

    # Widest lane-dense column width (multiple of 128) that divides n exactly.
    cols = next((c for c in (2048, 1024, 512, 256, 128) if n % c == 0), None)
    if cols is None:
        cols = 128
        n_main = n - (n % cols)   # lane-aligned prefix goes through the kernel
    else:
        n_main = n

    if n_main == 0:
        # Tiny input (< 128 elements): not worth a pallas_call.
        return _swish_jnp(x_flat).reshape(orig_shape)

    rows = n_main // cols
    x2d = x_flat[:n_main].reshape(rows, cols)

    # Byte-based block sizing: ~_TARGET_BLOCK_BYTES per buffer regardless of dtype.
    itemsize = jnp.dtype(x.dtype).itemsize
    block_elems = max(_TARGET_BLOCK_BYTES // itemsize, cols)
    tile_rows = max(8, ((block_elems // cols) // 8) * 8)

    # Guarantee >= 2 grid steps when possible so v7x's two TensorCores both
    # get work under dimension_semantics=("parallel",).
    if rows > 8:
        cap = (((rows + 1) // 2 + 7) // 8) * 8   # round_up(ceil(rows/2), 8)
    else:
        cap = 8
    tile_rows = min(tile_rows, cap)

    grid = (pl.cdiv(rows, tile_rows),)

    out2d = pl.pallas_call(
        _swish_kernel,
        out_shape=jax.ShapeDtypeStruct((rows, cols), x.dtype),
        grid_spec=pltpu.PrefetchScalarGridSpec(
            num_scalar_prefetch=0,
            grid=grid,
            in_specs=[pl.BlockSpec((tile_rows, cols), lambda i: (i, 0))],
            out_specs=pl.BlockSpec((tile_rows, cols), lambda i: (i, 0)),
        ),
        compiler_params=pltpu.CompilerParams(
            dimension_semantics=("parallel",),
            vmem_limit_bytes=_VMEM_LIMIT_BYTES,
        ),
    )(x2d)

    out_flat = out2d.reshape(-1)
    tail = n - n_main
    if tail:
        # < 128-element ragged tail: plain jnp, fused under jit. No full-tensor
        # pad/slice HBM pass.
        out_flat = jnp.concatenate([out_flat, _swish_jnp(x_flat[n_main:])])
    return out_flat.reshape(orig_shape)


# jit so all the ravel/reshape/concat plumbing fuses around the pallas_call.
swish = jax.jit(_swish_impl)


if __name__ == "__main__":
    key = jax.random.PRNGKey(0)

    # NCHW-like activation tensor: batch=2, channels=4, 16x16 spatial.
    x = jax.random.normal(key, (2, 4, 16, 16), dtype=jnp.float32)
    y = jax.block_until_ready(swish(x))
    y_ref = x * jax.nn.sigmoid(x)
    assert y.shape == x.shape and y.dtype == x.dtype
    assert jnp.allclose(y, y_ref, atol=1e-5, rtol=1e-5)

    # Ragged case (element count not a multiple of 128) exercises the tail path.
    x2 = jax.random.normal(jax.random.PRNGKey(1), (3, 97), dtype=jnp.float32)
    y2 = jax.block_until_ready(swish(x2))
    y2_ref = x2 * jax.nn.sigmoid(x2)
    assert y2.shape == x2.shape and y2.dtype == x2.dtype
    assert jnp.allclose(y2, y2_ref, atol=1e-5, rtol=1e-5)

    print("KERNEL_OK")
</pallas_src>

<mosaic_0001>
module attributes {stable_mosaic.version = 11 : i64} {
  func.func @_swish_kernel(%arg0: i32, %arg1: memref<8x2048xf32, #tpu.memory_space<vmem>>, %arg2: memref<8x2048xf32, #tpu.memory_space<vmem>>) attributes {dimension_semantics = [#tpu.dimension_semantics<parallel>], iteration_bounds = array<i64: 1>, scalar_prefetch = 0 : i64, scratch_operands = 0 : i64, tpu.core_type = #tpu.core_type<tc>, window_params = [{transform_indices = @transform_0, window_bounds = array<i64: 8, 2048>}, {transform_indices = @transform_1, window_bounds = array<i64: 8, 2048>}]} {
    %c0 = arith.constant 0 : index
    %c0_0 = arith.constant 0 : index
    %0 = vector.load %arg1[%c0, %c0_0] : memref<8x2048xf32, #tpu.memory_space<vmem>>, vector<8x2048xf32>
    %cst = arith.constant 5.000000e-01 : f32
    %1 = vector.broadcast %cst : f32 to vector<8x2048xf32>
    %2 = arith.mulf %1, %0 : vector<8x2048xf32>
    %3 = math.tanh %2 : vector<8x2048xf32>
    %4 = arith.mulf %2, %3 : vector<8x2048xf32>
    %5 = arith.addf %4, %2 : vector<8x2048xf32>
    %c0_1 = arith.constant 0 : index
    %c0_2 = arith.constant 0 : index
    %6 = vector.load %arg2[%c0_1, %c0_2] : memref<8x2048xf32, #tpu.memory_space<vmem>>, vector<8x2048xf32>
    tpu.vector_store %arg2[%c0_1, %c0_2], %5 {strides = array<i32>} : memref<8x2048xf32, #tpu.memory_space<vmem>>, vector<8x2048xf32>,
    return
  }
  func.func @transform_0(%arg0: i32) -> (i32, i32) {
    %c0_i32 = arith.constant 0 : i32
    %c0_i32_0 = arith.constant 0 : i32
    return %arg0, %c0_i32 : i32, i32
  }
  func.func @transform_1(%arg0: i32) -> (i32, i32) {
    %c0_i32 = arith.constant 0 : i32
    %c0_i32_0 = arith.constant 0 : i32
    return %arg0, %c0_i32 : i32, i32
  }
}

</mosaic_0001>

<llo_original>
// kernel: _swish_impl.1
$region0: #{_swish_impl.1}
  #allocation0 [shape = 'u32[]', space=smem, size = 0x4, offset = 0x4, fixed_abs, tag = 'smem constant byte address 0x4 - core index']
  #allocation1 [shape = 'u32[144,128]{1,0:T(1,128)}', space=vmem, size = 0x12000, scoped, tag = 'internal scratch']
  %s0 = inlined_call_operand.vmem [shape: f32[1,2048], index: 0, kind: input, shape index: {}]
  %s1 = inlined_call_operand.vmem [shape: f32[1,2048], index: 1, kind: output, shape index: {}]
  %s2 = sld [smem:[#allocation0]]
  $region33: #{_swish_impl.1} parent=0
    _
  %s4 = ssub.s32 1, %s2
  %s5 = scalar_select 0, %s4, %s2
  $region1: #{_swish_impl.1} parent=0
    #allocation2 [shape = 'u8[65536]{0}', space=vmem, size = 0x10000, scoped, tag = 'output window, operand 0, single buffered']
    // Predicated region
    $region2: #{_swish_impl.1} parent=1 // pred_check
      _
    $region3: #{_swish_impl.1} parent=1 // pred_check_branch
      %7 = sbr.rel (0) target = $region5
    $region4: #{_swish_impl.1} parent=1 // pred_region
      _
    $region5: #{_swish_impl.1} parent=1 // pred_fallthru
      _
    %v8 = vld [vmem:[%s0] sm:$0xff]
    %v9 = vld [vmem:[%s0 + $0x8] sm:$0xff]
    %v10 = vld [vmem:[%s0 + $0x10] sm:$0xff]
    %v11 = vld [vmem:[%s0 + $0x18] sm:$0xff]
    %v12 = vld [vmem:[%s0 + $0x20] sm:$0xff]
    %v13 = vld [vmem:[%s0 + $0x28] sm:$0xff]
    %v14 = vld [vmem:[%s0 + $0x30] sm:$0xff]
    %v15 = vld [vmem:[%s0 + $0x38] sm:$0xff]
    %v16 = vld [vmem:[%s0 + $0x40] sm:$0xff]
    %v17 = vld [vmem:[%s0 + $0x48] sm:$0xff]
    %v18 = vld [vmem:[%s0 + $0x50] sm:$0xff]
    %v19 = vld [vmem:[%s0 + $0x58] sm:$0xff]
    %v20 = vld [vmem:[%s0 + $0x60] sm:$0xff]
    %v21 = vld [vmem:[%s0 + $0x68] sm:$0xff]
    %v22 = vld [vmem:[%s0 + $0x70] sm:$0xff]
    %v23 = vld [vmem:[%s0 + $0x78] sm:$0xff]
    %v24 = vmul.f32 %v8, 0.5
    %v25 = vmul.f32 %v9, 0.5
    %v26 = vmul.f32 %v10, 0.5
    %v27 = vmul.f32 %v11, 0.5
    %v28 = vmul.f32 %v12, 0.5
    %v29 = vmul.f32 %v13, 0.5
    %v30 = vmul.f32 %v14, 0.5
    %v31 = vmul.f32 %v15, 0.5
    %v32 = vmul.f32 %v16, 0.5
    %v33 = vmul.f32 %v17, 0.5
    %v34 = vmul.f32 %v18, 0.5
    %v35 = vmul.f32 %v19, 0.5
    %v36 = vmul.f32 %v20, 0.5
    %v37 = vmul.f32 %v21, 0.5
    %v38 = vmul.f32 %v22, 0.5
    %v39 = vmul.f32 %v23, 0.5
    %v40 = vtanh.pop %v24
    %v41 = vtanh.pop %v25
    %v42 = vtanh.pop %v26
    %v43 = vtanh.pop %v27
    %v44 = vtanh.pop %v28
    %v45 = vtanh.pop %v29
    %v46 = vtanh.pop %v30
    %v47 = vtanh.pop %v31
    %v48 = vtanh.pop %v32
    %v49 = vtanh.pop %v33
    %v50 = vtanh.pop %v34
    %v51 = vtanh.pop %v35
    %v52 = vtanh.pop %v36
    %v53 = vtanh.pop %v37
    %v54 = vtanh.pop %v38
    %v55 = vtanh.pop %v39
    %v56 = vmul.f32 %v24, %v40
    %v57 = vmul.f32 %v25, %v41
    %v58 = vmul.f32 %v26, %v42
    %v59 = vmul.f32 %v27, %v43
    %v60 = vmul.f32 %v28, %v44
    %v61 = vmul.f32 %v29, %v45
    %v62 = vmul.f32 %v30, %v46
    %v63 = vmul.f32 %v31, %v47
    %v64 = vmul.f32 %v32, %v48
    %v65 = vmul.f32 %v33, %v49
    %v66 = vmul.f32 %v34, %v50
    %v67 = vmul.f32 %v35, %v51
    %v68 = vmul.f32 %v36, %v52
    %v69 = vmul.f32 %v37, %v53
    %v70 = vmul.f32 %v38, %v54
    %v71 = vmul.f32 %v39, %v55
    %v72 = vadd.f32 %v56, %v24
    %v73 = vadd.f32 %v57, %v25
    %v74 = vadd.f32 %v58, %v26
    %v75 = vadd.f32 %v59, %v27
    %v76 = vadd.f32 %v60, %v28
    %v77 = vadd.f32 %v61, %v29
    %v78 = vadd.f32 %v62, %v30
    %v79 = vadd.f32 %v63, %v31
    %v80 = vadd.f32 %v64, %v32
    %v81 = vadd.f32 %v65, %v33
    %v82 = vadd.f32 %v66, %v34
    %v83 = vadd.f32 %v67, %v35
    %v84 = vadd.f32 %v68, %v36
    %v85 = vadd.f32 %v69, %v37
    %v86 = vadd.f32 %v70, %v38
    %v87 = vadd.f32 %v71, %v39
    %88 = vst [vmem:[#allocation2] sm:$0xff] %v72
    %89 = vst [vmem:[#allocation2 + $0x8] sm:$0xff] %v73
    %90 = vst [vmem:[#allocation2 + $0x10] sm:$0xff] %v74
    %91 = vst [vmem:[#allocation2 + $0x18] sm:$0xff] %v75
    %92 = vst [vmem:[#allocation2 + $0x20] sm:$0xff] %v76
    %93 = vst [vmem:[#allocation2 + $0x28] sm:$0xff] %v77
    %94 = vst [vmem:[#allocation2 + $0x30] sm:$0xff] %v78
    %95 = vst [vmem:[#allocation2 + $0x38] sm:$0xff] %v79
    %96 = vst [vmem:[#allocation2 + $0x40] sm:$0xff] %v80
    %97 = vst [vmem:[#allocation2 + $0x48] sm:$0xff] %v81
    %98 = vst [vmem:[#allocation2 + $0x50] sm:$0xff] %v82
    %99 = vst [vmem:[#allocation2 + $0x58] sm:$0xff] %v83
    %100 = vst [vmem:[#allocation2 + $0x60] sm:$0xff] %v84
    %101 = vst [vmem:[#allocation2 + $0x68] sm:$0xff] %v85
    %102 = vst [vmem:[#allocation2 + $0x70] sm:$0xff] %v86
    %103 = vst [vmem:[#allocation2 + $0x78] sm:$0xff] %v87
    // Predicated region
    $region6: #{_swish_impl.1} parent=1 // pred_check
      _
    $region7: #{_swish_impl.1} parent=1 // pred_check_branch
      %105 = sbr.rel (0) target = $region9
    $region8: #{_swish_impl.1} parent=1 // pred_region
      // Predicated region
      $region10: #{_swish_impl.1} parent=8 // pred_check
        _
      $region11: #{_swish_impl.1} parent=8 // pred_check_branch
        %107 = sbr.rel (0) target = $region13
      $region12: #{_swish_impl.1} parent=8 // pred_region
        // Predicated region
        $region14: #{_swish_impl.1} parent=12 // pred_check
          _
        $region15: #{_swish_impl.1} parent=12 // pred_check_branch
          %109 = sbr.rel (0) target = $region17
        $region16: #{_swish_impl.1} parent=12 // pred_region
          loop: start=0, step=1, limit=1
          $region18: #{_swish_impl.1} parent=16 // loop_pre_header
            _
          $region19: #{_swish_impl.1} parent=16 // loop_header
            %s111 = sphi 0, %s115
            %p112 = scmp.ge.s32.totalorder %s111, 1
            %s116 = sphi [#allocation2], [#allocation2]
            %s117 = sphi %s1, %s1
          $region20: #{_swish_impl.1} parent=16 // loop_header_branch
            %114 = sbr.rel (%p112) target = $region24
          $region21: #{_swish_impl.1} parent=16 // loop_body
            %v118 = vld [vmem:[%s116] sm:$0xff]
            %119 = vst [vmem:[%s117] sm:$0xff] %v118
            %v120 = vld [vmem:[%s116 + $0x8] sm:$0xff]
            %121 = vst [vmem:[%s117 + $0x8] sm:$0xff] %v120
          $region22: #{_swish_impl.1} parent=16 // loop_footer
            %s115 = sadd.s32 1, %s111
          $region23: #{_swish_impl.1} parent=16 // loop_footer_branch
            %110 = sbr.rel target = $region19
          $region24: #{_swish_impl.1} parent=16 // loop_exit
            _
        $region17: #{_swish_impl.1} parent=12 // pred_fallthru
          _
        // Predicated region
        $region25: #{_swish_impl.1} parent=12 // pred_check
          _
        $region26: #{_swish_impl.1} parent=12 // pred_check_branch
          %123 = sbr.rel target = $region28
        $region27: #{_swish_impl.1} parent=12 // pred_region
          _
        $region28: #{_swish_impl.1} parent=12 // pred_fallthru
          _
      $region13: #{_swish_impl.1} parent=8 // pred_fallthru
        _
      %124 = vnop
    $region9: #{_swish_impl.1} parent=1 // pred_fallthru
      _
    // Predicated region
    $region29: #{_swish_impl.1} parent=1 // pred_check
      _
    $region30: #{_swish_impl.1} parent=1 // pred_check_branch
      %126 = sbr.rel (0) target = $region32
    $region31: #{_swish_impl.1} parent=1 // pred_region
      _
    $region32: #{_swish_impl.1} parent=1 // pred_fallthru
      _

</llo_original>
